<compile_context>
chip_gen: v7x
topology: tpu7x:2x2x1
jax: 0.10.0
libtpu: 0.0.40
codegen_flags: <defaults>
</compile_context>

<pallas_src>
import functools

import jax
import jax.numpy as jnp
from jax.experimental import pallas as pl
from jax.experimental.pallas import tpu as pltpu


# ---------------------------------------------------------------------------
# Kernels
# ---------------------------------------------------------------------------
def _self_loops_tiled_kernel(a_ref, mask_ref, o_ref):
    """Copy path: full-matrix 2-D tiling; diag math only on diagonal tiles."""
    tm, tn = a_ref.shape
    i = pl.program_id(0)
    j = pl.program_id(1)
    row_start = i * tm
    col_start = j * tn

    # Tile intersects the main diagonal iff its row/col ranges overlap.
    has_diag = jnp.logical_and(row_start < col_start + tn,
                               col_start < row_start + tm)

    @pl.when(has_diag)
    def _diag_tile():
        a = a_ref[...]                                            # [tm, tn]
        cs = pl.multiple_of(j * tn, 128)
        relu_m = jnp.maximum(mask_ref[:, pl.ds(cs, tn)], 0)       # [1, tn]
        # Global diagonal: row_start + r == col_start + c, via small iotas.
        row_ids = jax.lax.broadcasted_iota(jnp.int32, (tm, 1), 0) + row_start
        col_ids = jax.lax.broadcasted_iota(jnp.int32, (1, tn), 1) + col_start
        is_diag = col_ids == row_ids                              # [tm, tn]
        o_ref[...] = jnp.where(is_diag, a + relu_m, a)

    @pl.when(jnp.logical_not(has_diag))
    def _copy_tile():
        o_ref[...] = a_ref[...]


def _self_loops_diag_kernel(a_ref, mask_ref, o_ref):
    """Donated path: grid visits only diagonal T x T blocks (A aliased to out)."""
    t = a_ref.shape[0]
    i = pl.program_id(0)
    cs = pl.multiple_of(i * t, 128)
    relu_m = jnp.maximum(mask_ref[:, pl.ds(cs, t)], 0)            # [1, t]
    row_ids = jax.lax.broadcasted_iota(jnp.int32, (t, 1), 0)
    col_ids = jax.lax.broadcasted_iota(jnp.int32, (1, t), 1)
    is_diag = col_ids == row_ids                                  # [t, t]
    a = a_ref[...]
    o_ref[...] = jnp.where(is_diag, a + relu_m, a)


# ---------------------------------------------------------------------------
# Tiling helpers
# ---------------------------------------------------------------------------
def _sublane_quantum(dtype) -> int:
    """Packed-sublane quantum: 8 for 4-byte, 16 for 2-byte, 32 for 1-byte."""
    itemsize = jnp.dtype(dtype).itemsize
    return max(8, 8 * (4 // max(itemsize, 1)))


def _pick_tile(n: int, preferred: int, quantum: int) -> int:
    """Largest t <= preferred with t % quantum == 0 and n % t == 0."""
    t = min(preferred, n)
    t -= t % quantum
    while t >= quantum:
        if n % t == 0:
            return t
        t -= quantum
    return n


def _tile_defaults(dtype):
    """(tm_pref, tn_pref, vmem_limit_bytes) tuned per chip generation."""
    # Conservative fallback: safe within every chip's physical VMEM.
    tm_pref, tn_pref, vmem_limit = 512, 2048, 40 << 20
    try:
        vmem_bytes = pltpu.get_tpu_info().vmem_capacity_bytes
        if vmem_bytes >= (100 << 20):
            # v5e / v6e: 128 MiB physical VMEM -> bigger tiles amortize the
            # ~0.35us per-grid-step overhead.
            tm_pref, tn_pref, vmem_limit = 1024, 2048, 64 << 20
        else:
            # v7x: 64 MiB physical VMEM per TensorCore; double-buffered
            # in+out of a 1024x2048 f32 tile (~32 MiB) still fits under 48 MiB.
            tm_pref, tn_pref, vmem_limit = 1024, 2048, 48 << 20
    except Exception:
        pass
    return tm_pref, tn_pref, vmem_limit


# ---------------------------------------------------------------------------
# Wrapper
# ---------------------------------------------------------------------------
def self_loops(A: jax.Array, mask: jax.Array, *, donate: bool = False,
               tm: int | None = None, tn: int | None = None,
               diag_tile: int | None = None) -> jax.Array:
    """A: [N, N]; mask: [N] -> A + diag(relu(mask.astype(A.dtype)))."""
    n = A.shape[0]
    assert A.shape == (n, n), "A must be square"
    assert mask.shape == (n,), "mask must be length N"
    dtype = A.dtype

    # Cast BEFORE relu, same as PyTorch: mask.to(dtype=A.dtype) -> F.relu.
    mask2d = mask.astype(dtype).reshape(1, n)

    sub_q = _sublane_quantum(dtype)
    lane_q = 128
    n_pad = ((n + lane_q - 1) // lane_q) * lane_q   # multiple of 128 (>= sub_q)
    pad = n_pad - n

    tm_pref, tn_pref, vmem_limit = _tile_defaults(dtype)

    # ---- Donated / in-place path: only diagonal blocks are touched. --------
    if donate and pad == 0:
        t = diag_tile if diag_tile is not None else _pick_tile(n, 512, lane_q)
        assert t % lane_q == 0 and n % t == 0, "diag_tile must be a 128-multiple divisor of N"
        return pl.pallas_call(
            _self_loops_diag_kernel,
            out_shape=jax.ShapeDtypeStruct((n, n), dtype),
            grid=(n // t,),
            in_specs=[
                pl.BlockSpec((t, t), lambda i: (i, i)),   # diagonal A blocks
                pl.BlockSpec((1, n), lambda i: (0, 0)),   # resident mask
            ],
            out_specs=pl.BlockSpec((t, t), lambda i: (i, i)),
            input_output_aliases={0: 0},                  # A aliased to output
            compiler_params=pltpu.CompilerParams(
                dimension_semantics=("parallel",),
                vmem_limit_bytes=vmem_limit),
        )(A, mask2d)

    # ---- Default copy path (pads awkward N instead of full-extent blocks). -
    if pad:
        A_in = jnp.pad(A, ((0, pad), (0, pad)))
        mask_in = jnp.pad(mask2d, ((0, 0), (0, pad)))
    else:
        A_in, mask_in = A, mask2d

    if tm is None:
        tm = _pick_tile(n_pad, tm_pref, sub_q)
    if tn is None:
        tn = _pick_tile(n_pad, tn_pref, lane_q)
    assert tm % sub_q == 0 and n_pad % tm == 0, "tm must be a sublane-aligned divisor"
    assert tn % lane_q == 0 and n_pad % tn == 0, "tn must be a 128-multiple divisor"

    out = pl.pallas_call(
        _self_loops_tiled_kernel,
        out_shape=jax.ShapeDtypeStruct((n_pad, n_pad), dtype),
        grid=(n_pad // tm, n_pad // tn),
        in_specs=[
            pl.BlockSpec((tm, tn), lambda i, j: (i, j)),      # A tile
            pl.BlockSpec((1, n_pad), lambda i, j: (0, 0)),    # resident mask
        ],
        out_specs=pl.BlockSpec((tm, tn), lambda i, j: (i, j)),
        compiler_params=pltpu.CompilerParams(
            dimension_semantics=("parallel", "parallel"),
            vmem_limit_bytes=vmem_limit),
    )(A_in, mask_in)

    if pad:
        out = out[:n, :n]
    return out


class SelfLoopsJax:
    """Mirror of the PyTorch SelfLoops module (deterministic init)."""

    def __init__(self, num_nodes: int, trainable: bool, initial_factor: int = 2):
        # `trainable` only affects autograd in torch; forward value identical.
        self.mask = jnp.ones((num_nodes,), dtype=jnp.float32) * initial_factor

    def __call__(self, A: jax.Array, *, donate: bool = False) -> jax.Array:
        return self_loops(A, self.mask, donate=donate)


if __name__ == "__main__":
    key = jax.random.PRNGKey(0)
    k0, k1, k2, k3, k4 = jax.random.split(key, 5)

    # 1) Module-style small demo: N=16 -> internally padded to 128, sliced back.
    n0 = 16
    A0 = jax.random.normal(k0, (n0, n0), dtype=jnp.float32)
    module = SelfLoopsJax(num_nodes=n0, trainable=True, initial_factor=2)
    out0 = jax.block_until_ready(module(A0))
    ref0 = A0 + jnp.diag(jnp.maximum(module.mask.astype(A0.dtype), 0.0))
    assert out0.shape == (n0, n0) and out0.dtype == A0.dtype
    assert jnp.allclose(out0, ref0, atol=1e-6), "mismatch vs reference (N=16)"

    # 2) Tiled copy path: rectangular tiles, diagonal + off-diagonal tiles,
    #    mask with negatives so relu actually matters.
    n1 = 256
    A1 = jax.random.normal(k1, (n1, n1), dtype=jnp.float32)
    m1 = jax.random.normal(k2, (n1,), dtype=jnp.float32)
    out1 = jax.block_until_ready(self_loops(A1, m1, tm=64, tn=128))
    ref1 = A1 + jnp.diag(jnp.maximum(m1, 0.0))
    assert out1.shape == (n1, n1) and out1.dtype == A1.dtype
    assert jnp.allclose(out1, ref1, atol=1e-6), "mismatch vs reference (N=256)"

    # 3) Donated / in-place path: diagonal-blocks-only grid with aliasing,
    #    driven through jit + donate_argnums so the alias is genuinely in-place.
    n2 = 256
    A2 = jax.random.normal(k3, (n2, n2), dtype=jnp.float32)
    m2 = jax.random.normal(k4, (n2,), dtype=jnp.float32)
    ref2 = A2 + jnp.diag(jnp.maximum(m2, 0.0))          # compute before donation
    donated_fn = jax.jit(functools.partial(self_loops, donate=True, diag_tile=128),
                         donate_argnums=(0,))
    out2 = jax.block_until_ready(donated_fn(A2, m2))
    assert out2.shape == (n2, n2) and out2.dtype == jnp.float32
    assert jnp.allclose(out2, ref2, atol=1e-6), "mismatch vs reference (donated)"

    print("KERNEL_OK")
</pallas_src>

<mosaic_0001>
module attributes {stable_mosaic.version = 11 : i64} {
  func.func @_self_loops_tiled_kernel(%arg0: i32, %arg1: i32, %arg2: memref<128x128xf32, #tpu.memory_space<vmem>>, %arg3: memref<1x128xf32, #tpu.memory_space<vmem>>, %arg4: memref<128x128xf32, #tpu.memory_space<vmem>>) attributes {dimension_semantics = [#tpu.dimension_semantics<parallel>, #tpu.dimension_semantics<parallel>], iteration_bounds = array<i64: 1, 1>, scalar_prefetch = 0 : i64, scratch_operands = 0 : i64, tpu.core_type = #tpu.core_type<tc>, window_params = [{transform_indices = @transform_0, window_bounds = array<i64: 128, 128>}, {pipeline_mode = #tpu.pipeline_mode<synchronous>, transform_indices = @transform_1, window_bounds = array<i64: 1, 128>}, {transform_indices = @transform_2, window_bounds = array<i64: 128, 128>}]} {
    %c128_i32 = arith.constant 128 : i32
    %0 = arith.muli %arg0, %c128_i32 : i32
    %c128_i32_0 = arith.constant 128 : i32
    %1 = arith.muli %arg1, %c128_i32_0 : i32
    %c128_i32_1 = arith.constant 128 : i32
    %2 = arith.addi %1, %c128_i32_1 : i32
    %3 = arith.cmpi slt, %0, %2 : i32
    %c128_i32_2 = arith.constant 128 : i32
    %4 = arith.addi %0, %c128_i32_2 : i32
    %5 = arith.cmpi slt, %1, %4 : i32
    %6 = arith.andi %3, %5 : i1
    %7 = arith.extui %6 : i1 to i32
    %c0_i32 = arith.constant 0 : i32
    %8 = arith.cmpi ne, %7, %c0_i32 : i32
    scf.if %8 {
      %c0 = arith.constant 0 : index
      %c0_4 = arith.constant 0 : index
      %12 = vector.load %arg2[%c0, %c0_4] : memref<128x128xf32, #tpu.memory_space<vmem>>, vector<128x128xf32>
      %c128_i32_5 = arith.constant 128 : i32
      %13 = arith.muli %arg1, %c128_i32_5 : i32
      %14 = tpu.assume_multiple %13, 128 : i32
      %c0_6 = arith.constant 0 : index
      %15 = arith.index_cast %14 : i32 to index
      %16 = vector.load %arg3[%c0_6, %15] : memref<1x128xf32, #tpu.memory_space<vmem>>, vector<1x128xf32>
      %cst = arith.constant 0.000000e+00 : f32
      %17 = vector.broadcast %cst : f32 to vector<1x128xf32>
      %18 = arith.maximumf %16, %17 : vector<1x128xf32>
      %19 = tpu.iota {dimensions = array<i32: 0>} : vector<128x1xi32>
      %20 = vector.broadcast %0 : i32 to vector<128x1xi32>
      %21 = arith.addi %19, %20 : vector<128x1xi32>
      %22 = tpu.iota {dimensions = array<i32: 1>} : vector<1x128xi32>
      %23 = vector.broadcast %1 : i32 to vector<1x128xi32>
      %24 = arith.addi %22, %23 : vector<1x128xi32>
      %25 = vector.broadcast %24 : vector<1x128xi32> to vector<128x128xi32>
      %26 = vector.broadcast %21 : vector<128x1xi32> to vector<128x128xi32>
      %27 = arith.cmpi eq, %25, %26 : vector<128x128xi32>
      %28 = vector.broadcast %18 : vector<1x128xf32> to vector<128x128xf32>
      %29 = arith.addf %12, %28 : vector<128x128xf32>
      %30 = arith.select %27, %29, %12 : vector<128x128xi1>, vector<128x128xf32>
      %c0_7 = arith.constant 0 : index
      %c0_8 = arith.constant 0 : index
      %31 = vector.load %arg4[%c0_7, %c0_8] : memref<128x128xf32, #tpu.memory_space<vmem>>, vector<128x128xf32>
      tpu.vector_store %arg4[%c0_7, %c0_8], %30 {strides = array<i32>} : memref<128x128xf32, #tpu.memory_space<vmem>>, vector<128x128xf32>,
    } else {
    }
    %true = arith.constant true
    %9 = arith.xori %6, %true : i1
    %10 = arith.extui %9 : i1 to i32
    %c0_i32_3 = arith.constant 0 : i32
    %11 = arith.cmpi ne, %10, %c0_i32_3 : i32
    scf.if %11 {
      %c0 = arith.constant 0 : index
      %c0_4 = arith.constant 0 : index
      %12 = vector.load %arg2[%c0, %c0_4] : memref<128x128xf32, #tpu.memory_space<vmem>>, vector<128x128xf32>
      %c0_5 = arith.constant 0 : index
      %c0_6 = arith.constant 0 : index
      %13 = vector.load %arg4[%c0_5, %c0_6] : memref<128x128xf32, #tpu.memory_space<vmem>>, vector<128x128xf32>
      tpu.vector_store %arg4[%c0_5, %c0_6], %12 {strides = array<i32>} : memref<128x128xf32, #tpu.memory_space<vmem>>, vector<128x128xf32>,
    } else {
    }
    return
  }
  func.func @transform_0(%arg0: i32, %arg1: i32) -> (i32, i32) {
    %c0_i32 = arith.constant 0 : i32
    return %arg0, %arg1 : i32, i32
  }
  func.func @transform_1(%arg0: i32, %arg1: i32) -> (i32, i32) {
    %c0_i32 = arith.constant 0 : i32
    %c0_i32_0 = arith.constant 0 : i32
    %c0_i32_1 = arith.constant 0 : i32
    return %c0_i32, %c0_i32_0 : i32, i32
  }
  func.func @transform_2(%arg0: i32, %arg1: i32) -> (i32, i32) {
    %c0_i32 = arith.constant 0 : i32
    return %arg0, %arg1 : i32, i32
  }
}

</mosaic_0001>

<llo_original>
// kernel: tpu_custom_call.1
$region0: #{tpu_custom_call.1}
  #allocation0 [shape = 'u32[]', space=smem, size = 0x4, offset = 0x4, fixed_abs, tag = 'smem constant byte address 0x4 - core index']
  #allocation1 [shape = 'u32[144,128]{1,0:T(1,128)}', space=vmem, size = 0x12000, scoped, tag = 'internal scratch']
  %s0 = inlined_call_operand.hbm [shape: f32[128,128], index: 0, kind: input, shape index: {}]
  %s1 = inlined_call_operand.vmem [shape: f32[1,128], index: 1, kind: input, shape index: {}]
  %s2 = inlined_call_operand.hbm [shape: f32[128,128], index: 2, kind: output, shape index: {}]
  %s3 = sld [smem:[#allocation0]]
  $region30: #{tpu_custom_call.1} parent=0
    _
  %s5 = ssub.s32 1, %s3
  %s6 = scalar_select 0, %s5, %s3
  $region1: #{tpu_custom_call.1} parent=0
    #allocation2 [shape = 'u8[65536]{0}', space=vmem, size = 0x10000, scoped, tag = 'input window, operand 0, single buffered']
    #allocation3 [shape = 's32[1]{0}', space=sflag, size = 0x4, scoped, tag = 'scoped memory for tpu_custom_call.1']
    #allocation4 [shape = 's32[1]{0}', space=sflag, size = 0x4, scoped, tag = 'scoped memory for tpu_custom_call.1']
    #allocation5 [shape = 'u8[65536]{0}', space=vmem, size = 0x10000, scoped, tag = 'output window, operand 0, single buffered']
    %7 = vsyncpa [#allocation3], 0
    %8 = vsyncpa [#allocation4], 0
    // Predicated region
    $region2: #{tpu_custom_call.1} parent=1 // pred_check
      _
    $region3: #{tpu_custom_call.1} parent=1 // pred_check_branch
      %10 = sbr.rel (0) target = $region5
    $region4: #{tpu_custom_call.1} parent=1 // pred_region
      %s12 = ssub.s32 2048, 2048
      %13 = vsyncadd [#allocation3], %s12
      %s14 = sshll.u32 [#allocation2], 4
      %s15 = int_to_ptr.vmem [resolvable:$true] %s14
      %20 = dma.hbm_to_vmem [thread:$0]  %s0, 2048, %s15, [#allocation3], 128, 128, 8
    $region5: #{tpu_custom_call.1} parent=1 // pred_fallthru
      _
    // Predicated region
    $region6: #{tpu_custom_call.1} parent=1 // pred_check
      _
    $region7: #{tpu_custom_call.1} parent=1 // pred_check_branch
      %22 = sbr.rel (0) target = $region9
    $region8: #{tpu_custom_call.1} parent=1 // pred_region
      _
    $region9: #{tpu_custom_call.1} parent=1 // pred_fallthru
      _
    // Predicated region
    $region10: #{tpu_custom_call.1} parent=1 // pred_check
      _
    $region11: #{tpu_custom_call.1} parent=1 // pred_check_branch
      %24 = sbr.rel (0) target = $region13
    $region12: #{tpu_custom_call.1} parent=1 // pred_region
      %25 = dma.done [#allocation3], 2048
    $region13: #{tpu_custom_call.1} parent=1 // pred_fallthru
      _
    %s26 = smul.u32 0, 128
    %s27 = smul.u32 0, 128
    %s28 = sadd.s32 %s27, 128
    %p29 = scmp.lt.s32.totalorder %s26, %s28
    %s30 = sadd.s32 %s26, 128
    %p31 = scmp.lt.s32.totalorder %s27, %s30
    %p32 = pnand %p29, %p31
    %p33 = pneg %p32
    // Predicated region
    $region14: #{tpu_custom_call.1} parent=1 // pred_check
      _
    $region15: #{tpu_custom_call.1} parent=1 // pred_check_branch
      %35 = sbr.rel (%p32) target = $region17
    $region16: #{tpu_custom_call.1} parent=1 // pred_region
      %v36 = vld [vmem:[#allocation2] sm:$0xff]
      %v37 = vld [vmem:[#allocation2 + $0x8] sm:$0xff]
      %v38 = vld [vmem:[#allocation2 + $0x10] sm:$0xff]
      %v39 = vld [vmem:[#allocation2 + $0x18] sm:$0xff]
      %v40 = vld [vmem:[#allocation2 + $0x20] sm:$0xff]
      %v41 = vld [vmem:[#allocation2 + $0x28] sm:$0xff]
      %v42 = vld [vmem:[#allocation2 + $0x30] sm:$0xff]
      %v43 = vld [vmem:[#allocation2 + $0x38] sm:$0xff]
      %v44 = vld [vmem:[#allocation2 + $0x40] sm:$0xff]
      %v45 = vld [vmem:[#allocation2 + $0x48] sm:$0xff]
      %v46 = vld [vmem:[#allocation2 + $0x50] sm:$0xff]
      %v47 = vld [vmem:[#allocation2 + $0x58] sm:$0xff]
      %v48 = vld [vmem:[#allocation2 + $0x60] sm:$0xff]
      %v49 = vld [vmem:[#allocation2 + $0x68] sm:$0xff]
      %v50 = vld [vmem:[#allocation2 + $0x70] sm:$0xff]
      %v51 = vld [vmem:[#allocation2 + $0x78] sm:$0xff]
      %s52 = sshra.s32 %s27, 7
      %s53 = sand.u32 %s27, 127
      %s54 = scalar_lea.vmem %s1, %s52
      %v55 = vld [vmem:[%s54] sm:$0x1]
      %v56 = vmax.f32 %v55, 0.0
      %v57 = vlaneseq
      %v58 = vshrl.u32 %v57, 7
      %v59 = vadd.s32 %v58, 8
      %v60 = vadd.s32 %v58, 16
      %v61 = vadd.s32 %v58, 24
      %v62 = vadd.s32 %v58, 32
      %v63 = vadd.s32 %v58, 40
      %v64 = vadd.s32 %v58, 48
      %v65 = vadd.s32 %v58, 56
      %v66 = vadd.s32 %v58, 64
      %v67 = vadd.s32 %v58, 72
      %v68 = vadd.s32 %v58, 80
      %v69 = vadd.s32 %v58, 88
      %v70 = vadd.s32 %v58, 96
      %v71 = vadd.s32 %v58, 104
      %v72 = vadd.s32 %v58, 112
      %v73 = vadd.s32 %v58, 120
      %v74 = vstv %s26
      %v75 = vadd.s32 %v58, %v74
      %v76 = vadd.s32 %v59, %v74
      %v77 = vadd.s32 %v60, %v74
      %v78 = vadd.s32 %v61, %v74
      %v79 = vadd.s32 %v62, %v74
      %v80 = vadd.s32 %v63, %v74
      %v81 = vadd.s32 %v64, %v74
      %v82 = vadd.s32 %v65, %v74
      %v83 = vadd.s32 %v66, %v74
      %v84 = vadd.s32 %v67, %v74
      %v85 = vadd.s32 %v68, %v74
      %v86 = vadd.s32 %v69, %v74
      %v87 = vadd.s32 %v70, %v74
      %v88 = vadd.s32 %v71, %v74
      %v89 = vadd.s32 %v72, %v74
      %v90 = vadd.s32 %v73, %v74
      %v91 = vlaneseq
      %v92 = vand.u32 %v91, 127
      %v93 = vstv %s27
      %v94 = vadd.s32 %v92, %v93
      %vm95 = vcmp.eq.s32.totalorder %v94, %v75
      %vm96 = vcmp.eq.s32.totalorder %v94, %v76
      %vm97 = vcmp.eq.s32.totalorder %v94, %v77
      %vm98 = vcmp.eq.s32.totalorder %v94, %v78
      %vm99 = vcmp.eq.s32.totalorder %v94, %v79
      %vm100 = vcmp.eq.s32.totalorder %v94, %v80
      %vm101 = vcmp.eq.s32.totalorder %v94, %v81
      %vm102 = vcmp.eq.s32.totalorder %v94, %v82
      %vm103 = vcmp.eq.s32.totalorder %v94, %v83
      %vm104 = vcmp.eq.s32.totalorder %v94, %v84
      %vm105 = vcmp.eq.s32.totalorder %v94, %v85
      %vm106 = vcmp.eq.s32.totalorder %v94, %v86
      %vm107 = vcmp.eq.s32.totalorder %v94, %v87
      %vm108 = vcmp.eq.s32.totalorder %v94, %v88
      %vm109 = vcmp.eq.s32.totalorder %v94, %v89
      %vm110 = vcmp.eq.s32.totalorder %v94, %v90
      %v112 = vlaneseq
      %v113 = vshrl.u32 %v112, 7
      %v114 = vsub.s32 0, %v113
      %v115 = vrot.slane %v56, %v114
      %v117 = vadd.f32 %v36, %v115
      %v118 = vadd.f32 %v37, %v115
      %v119 = vadd.f32 %v38, %v115
      %v120 = vadd.f32 %v39, %v115
      %v121 = vadd.f32 %v40, %v115
      %v122 = vadd.f32 %v41, %v115
      %v123 = vadd.f32 %v42, %v115
      %v124 = vadd.f32 %v43, %v115
      %v125 = vadd.f32 %v44, %v115
      %v126 = vadd.f32 %v45, %v115
      %v127 = vadd.f32 %v46, %v115
      %v128 = vadd.f32 %v47, %v115
      %v129 = vadd.f32 %v48, %v115
      %v130 = vadd.f32 %v49, %v115
      %v131 = vadd.f32 %v50, %v115
      %v132 = vadd.f32 %v51, %v115
      %v133 = vsel %vm95, %v117, %v36
      %v134 = vsel %vm96, %v118, %v37
      %v135 = vsel %vm97, %v119, %v38
      %v136 = vsel %vm98, %v120, %v39
      %v137 = vsel %vm99, %v121, %v40
      %v138 = vsel %vm100, %v122, %v41
      %v139 = vsel %vm101, %v123, %v42
      %v140 = vsel %vm102, %v124, %v43
      %v141 = vsel %vm103, %v125, %v44
      %v142 = vsel %vm104, %v126, %v45
      %v143 = vsel %vm105, %v127, %v46
      %v144 = vsel %vm106, %v128, %v47
      %v145 = vsel %vm107, %v129, %v48
      %v146 = vsel %vm108, %v130, %v49
      %v147 = vsel %vm109, %v131, %v50
      %v148 = vsel %vm110, %v132, %v51
      %149 = vst [vmem:[#allocation5] sm:$0xff] %v133
      %150 = vst [vmem:[#allocation5 + $0x8] sm:$0xff] %v134
      %151 = vst [vmem:[#allocation5 + $0x10] sm:$0xff] %v135
      %152 = vst [vmem:[#allocation5 + $0x18] sm:$0xff] %v136
      %153 = vst [vmem:[#allocation5 + $0x20] sm:$0xff] %v137
      %154 = vst [vmem:[#allocation5 + $0x28] sm:$0xff] %v138
      %155 = vst [vmem:[#allocation5 + $0x30] sm:$0xff] %v139
      %156 = vst [vmem:[#allocation5 + $0x38] sm:$0xff] %v140
      %157 = vst [vmem:[#allocation5 + $0x40] sm:$0xff] %v141
      %158 = vst [vmem:[#allocation5 + $0x48] sm:$0xff] %v142
      %159 = vst [vmem:[#allocation5 + $0x50] sm:$0xff] %v143
      %160 = vst [vmem:[#allocation5 + $0x58] sm:$0xff] %v144
      %161 = vst [vmem:[#allocation5 + $0x60] sm:$0xff] %v145
      %162 = vst [vmem:[#allocation5 + $0x68] sm:$0xff] %v146
      %163 = vst [vmem:[#allocation5 + $0x70] sm:$0xff] %v147
      %164 = vst [vmem:[#allocation5 + $0x78] sm:$0xff] %v148
    $region17: #{tpu_custom_call.1} parent=1 // pred_fallthru
      _
    %p165 = pneg %p33
    // Predicated region
    $region18: #{tpu_custom_call.1} parent=1 // pred_check
      _
    $region19: #{tpu_custom_call.1} parent=1 // pred_check_branch
      %167 = sbr.rel (%p33) target = $region21
    $region20: #{tpu_custom_call.1} parent=1 // pred_region
      %v168 = vld [vmem:[#allocation2] sm:$0xff]
      %v169 = vld [vmem:[#allocation2 + $0x8] sm:$0xff]
      %v170 = vld [vmem:[#allocation2 + $0x10] sm:$0xff]
      %v171 = vld [vmem:[#allocation2 + $0x18] sm:$0xff]
      %v172 = vld [vmem:[#allocation2 + $0x20] sm:$0xff]
      %v173 = vld [vmem:[#allocation2 + $0x28] sm:$0xff]
      %v174 = vld [vmem:[#allocation2 + $0x30] sm:$0xff]
      %v175 = vld [vmem:[#allocation2 + $0x38] sm:$0xff]
      %v176 = vld [vmem:[#allocation2 + $0x40] sm:$0xff]
      %v177 = vld [vmem:[#allocation2 + $0x48] sm:$0xff]
      %v178 = vld [vmem:[#allocation2 + $0x50] sm:$0xff]
      %v179 = vld [vmem:[#allocation2 + $0x58] sm:$0xff]
      %v180 = vld [vmem:[#allocation2 + $0x60] sm:$0xff]
      %v181 = vld [vmem:[#allocation2 + $0x68] sm:$0xff]
      %v182 = vld [vmem:[#allocation2 + $0x70] sm:$0xff]
      %v183 = vld [vmem:[#allocation2 + $0x78] sm:$0xff]
      %184 = vst [vmem:[#allocation5] sm:$0xff] %v168
      %185 = vst [vmem:[#allocation5 + $0x8] sm:$0xff] %v169
      %186 = vst [vmem:[#allocation5 + $0x10] sm:$0xff] %v170
      %187 = vst [vmem:[#allocation5 + $0x18] sm:$0xff] %v171
      %188 = vst [vmem:[#allocation5 + $0x20] sm:$0xff] %v172
      %189 = vst [vmem:[#allocation5 + $0x28] sm:$0xff] %v173
      %190 = vst [vmem:[#allocation5 + $0x30] sm:$0xff] %v174
      %191 = vst [vmem:[#allocation5 + $0x38] sm:$0xff] %v175
      %192 = vst [vmem:[#allocation5 + $0x40] sm:$0xff] %v176
      %193 = vst [vmem:[#allocation5 + $0x48] sm:$0xff] %v177
      %194 = vst [vmem:[#allocation5 + $0x50] sm:$0xff] %v178
      %195 = vst [vmem:[#allocation5 + $0x58] sm:$0xff] %v179
      %196 = vst [vmem:[#allocation5 + $0x60] sm:$0xff] %v180
      %197 = vst [vmem:[#allocation5 + $0x68] sm:$0xff] %v181
      %198 = vst [vmem:[#allocation5 + $0x70] sm:$0xff] %v182
      %199 = vst [vmem:[#allocation5 + $0x78] sm:$0xff] %v183
    $region21: #{tpu_custom_call.1} parent=1 // pred_fallthru
      _
    // Predicated region
    $region22: #{tpu_custom_call.1} parent=1 // pred_check
      _
    $region23: #{tpu_custom_call.1} parent=1 // pred_check_branch
      %201 = sbr.rel (0) target = $region25
    $region24: #{tpu_custom_call.1} parent=1 // pred_region
      %s203 = ssub.s32 2048, 2048
      %204 = vsyncadd [#allocation4], %s203
      %s205 = sshll.u32 [#allocation5], 4
      %s206 = int_to_ptr.vmem [resolvable:$true] %s205
      %211 = dma.vmem_to_hbm [thread:$0]  %s206, 2048, %s2, [#allocation4], 128, 128, 8
    $region25: #{tpu_custom_call.1} parent=1 // pred_fallthru
      _
    // Predicated region
    $region26: #{tpu_custom_call.1} parent=1 // pred_check
      _
    $region27: #{tpu_custom_call.1} parent=1 // pred_check_branch
      %213 = sbr.rel (0) target = $region29
    $region28: #{tpu_custom_call.1} parent=1 // pred_region
      %214 = dma.done [#allocation4], 2048
    $region29: #{tpu_custom_call.1} parent=1 // pred_fallthru
      _
    %215 = vsyncpa [#allocation3], 1
    %216 = vsyncpa [#allocation4], 1

</llo_original>
